<compile_context>
chip_gen: v5e
topology: v5e:2x2
jax: 0.10.0
libtpu: 0.0.40
codegen_flags: <defaults>
</compile_context>

<pallas_src>
import jax
import jax.numpy as jnp
from jax.experimental import pallas as pl
from jax.experimental.pallas import tpu as pltpu


# ---------------------------------------------------------------------------
# Fused Pallas kernel: encoder (2x GCNConv) + in-kernel gather + bilinear head
# ---------------------------------------------------------------------------
def gae_fused_kernel(a_ref, x_ref, w1_ref, b1_ref, w2_ref, b2_ref,
                     wb_ref, bb_ref, src_ref, dst_ref, out_ref):
    f32 = jnp.float32
    bf16 = jnp.bfloat16

    n_pad = a_ref.shape[1]
    e_pad = out_ref.shape[1]

    # --- encoder layer 1: relu(A_hat @ X @ W1 + b1) -------------------------
    a = a_ref[...].astype(bf16)                                   # (N, N) bf16 feed
    xw = jnp.dot(x_ref[...].astype(bf16), w1_ref[...].astype(bf16),
                 preferred_element_type=f32)                      # (N, H)
    h = jnp.dot(a, xw.astype(bf16), preferred_element_type=f32) + b1_ref[...]
    h = jnp.maximum(h, 0.0)                                       # f32 ReLU

    # --- encoder layer 2: Z = A_hat @ H @ W2 + b2 ---------------------------
    hw = jnp.dot(h.astype(bf16), w2_ref[...].astype(bf16),
                 preferred_element_type=f32)                      # (N, C)
    z = jnp.dot(a, hw.astype(bf16), preferred_element_type=f32) + b2_ref[...]

    # --- decoder: gather endpoints via one-hot selection matmuls ------------
    node_iota = jax.lax.broadcasted_iota(jnp.int32, (e_pad, n_pad), 1)
    sel_src = (src_ref[...] == node_iota).astype(f32)             # (E, N)
    sel_dst = (dst_ref[...] == node_iota).astype(f32)             # (E, N)
    src = jnp.dot(sel_src, z, preferred_element_type=f32)         # (E, C) = z[src_idx]
    dst = jnp.dot(sel_dst, z, preferred_element_type=f32)         # (E, C) = z[dst_idx]

    # --- bilinear: score[e] = src[e] @ Wb @ dst[e] + b, sigmoid -------------
    t = jnp.dot(src, wb_ref[...], preferred_element_type=f32)     # (E, C)
    s_full = jax.lax.dot_general(t, dst, (((1,), (1,)), ((), ())),
                                 preferred_element_type=f32)      # (E, E)
    r = jax.lax.broadcasted_iota(jnp.int32, (e_pad, e_pad), 0)
    c = jax.lax.broadcasted_iota(jnp.int32, (e_pad, e_pad), 1)
    # diagonal of s_full, reduced along sublanes -> lane-dense (1, E) row
    scores = jnp.sum(jnp.where(r == c, s_full, 0.0), axis=0, keepdims=True)
    out_ref[...] = jax.nn.sigmoid(scores + bb_ref[0, 0])          # (1, E)


_VMEM = pl.BlockSpec(memory_space=pltpu.MemorySpace.VMEM)
_SMEM = pl.BlockSpec(memory_space=pltpu.MemorySpace.SMEM)


def _rup(x, m):
    return ((x + m - 1) // m) * m


def _pad2(a, shape):
    return jnp.pad(a, [(0, t - s) for s, t in zip(a.shape, shape)])


def gae_fused(a_hat, x, w1, b1, w2, b2, wb, bb, src_idx, dst_idx, num_edges):
    """Pads everything to lane/sublane-friendly sizes and runs the fused kernel."""
    n, c_in = x.shape
    hidden = w1.shape[1]
    c_out = w2.shape[1]
    e = num_edges

    n_pad = _rup(n, 128)
    e_pad = _rup(e, 128)
    ci_pad = _rup(c_in, 128)
    h_pad = _rup(hidden, 128)
    co_pad = _rup(c_out, 128)

    a_p = _pad2(a_hat, (n_pad, n_pad))
    x_p = _pad2(x, (n_pad, ci_pad))
    w1_p = _pad2(w1, (ci_pad, h_pad))
    b1_p = _pad2(b1, (1, h_pad))
    w2_p = _pad2(w2, (h_pad, co_pad))
    b2_p = _pad2(b2, (1, co_pad))
    wb_p = _pad2(wb, (co_pad, co_pad))
    src_p = _pad2(src_idx.reshape(e, 1).astype(jnp.int32), (e_pad, 1))
    dst_p = _pad2(dst_idx.reshape(e, 1).astype(jnp.int32), (e_pad, 1))

    scores = pl.pallas_call(
        gae_fused_kernel,
        out_shape=jax.ShapeDtypeStruct((1, e_pad), jnp.float32),
        in_specs=[_VMEM] * 7 + [_SMEM] + [_VMEM] * 2,
        out_specs=_VMEM,
    )(a_p, x_p, w1_p, b1_p, w2_p, b2_p, wb_p, bb, src_p, dst_p)

    return scores[0, :e]


# ---------------------------------------------------------------------------
# Model glue (plain JAX): adjacency normalization + parameter setup
# ---------------------------------------------------------------------------
def build_normalized_adjacency(edge_index, num_nodes):
    """Dense GCN-normalized adjacency, A_hat[tgt, src], matching PyG gcn_norm:
    duplicate edges are summed, self-loops (weight 1) added only where missing."""
    src = edge_index[0]
    tgt = edge_index[1]
    adj = jnp.zeros((num_nodes, num_nodes), jnp.float32).at[tgt, src].add(1.0)
    has_self = jnp.diagonal(adj) > 0
    adj = adj + jnp.diag(jnp.where(has_self, 0.0, 1.0))
    deg = jnp.sum(adj, axis=1)                       # in-degree incl. self-loops
    dis = jnp.where(deg > 0, jax.lax.rsqrt(deg), 0.0)
    return dis[:, None] * adj * dis[None, :]


def init_params(key, in_channels, out_channels):
    k1, k2, k3, k4 = jax.random.split(key, 4)
    hidden = 2 * out_channels
    return {
        # GCNConv weights used as x @ W (shape (in, out)); biases broadcast (1, out)
        "w1": jax.random.normal(k1, (in_channels, hidden), jnp.float32) * 0.1,
        "b1": jnp.zeros((1, hidden), jnp.float32),
        "w2": jax.random.normal(k2, (hidden, out_channels), jnp.float32) * 0.1,
        "b2": jnp.zeros((1, out_channels), jnp.float32),
        # torch.nn.Bilinear(out, out, 1): weight (1, out, out) -> (out, out), bias (1,)
        "wb": jax.random.normal(k3, (out_channels, out_channels), jnp.float32) * 0.1,
        "bb": jax.random.normal(k4, (1, 1), jnp.float32) * 0.1,
    }


def gae_forward(params, x, edge_index):
    n = x.shape[0]
    e = edge_index.shape[1]
    a_hat = build_normalized_adjacency(edge_index, n)
    return gae_fused(a_hat, x,
                     params["w1"], params["b1"], params["w2"], params["b2"],
                     params["wb"], params["bb"],
                     edge_index[0], edge_index[1], e)   # matches torch .squeeze()


# ---------------------------------------------------------------------------
# Main
# ---------------------------------------------------------------------------
if __name__ == "__main__":
    key = jax.random.PRNGKey(0)
    k_x, k_e, k_p = jax.random.split(key, 3)

    num_nodes = 16
    in_channels = 8
    out_channels = 4
    num_edges = 24

    x = jax.random.normal(k_x, (num_nodes, in_channels), jnp.float32)
    edge_index = jax.random.randint(k_e, (2, num_edges), 0, num_nodes, dtype=jnp.int32)

    params = init_params(k_p, in_channels, out_channels)

    out = gae_forward(params, x, edge_index)
    out = jax.block_until_ready(out)

    assert out.shape == (num_edges,), out.shape
    assert bool(jnp.all(jnp.isfinite(out)))
    assert bool(jnp.all((out >= 0.0) & (out <= 1.0)))

    print("KERNEL_OK")
</pallas_src>

<mosaic_0001>
module attributes {stable_mosaic.version = 11 : i64} {
  func.func @gae_fused_kernel(%arg0: memref<128x128xf32, #tpu.memory_space<vmem>>, %arg1: memref<128x128xf32, #tpu.memory_space<vmem>>, %arg2: memref<128x128xf32, #tpu.memory_space<vmem>>, %arg3: memref<1x128xf32, #tpu.memory_space<vmem>>, %arg4: memref<128x128xf32, #tpu.memory_space<vmem>>, %arg5: memref<1x128xf32, #tpu.memory_space<vmem>>, %arg6: memref<128x128xf32, #tpu.memory_space<vmem>>, %arg7: memref<1x1xf32, #tpu.memory_space<smem>>, %arg8: memref<128x1xi32, #tpu.memory_space<vmem>>, %arg9: memref<128x1xi32, #tpu.memory_space<vmem>>, %arg10: memref<1x128xf32, #tpu.memory_space<vmem>>) attributes {dimension_semantics = [], scalar_prefetch = 0 : i64, scratch_operands = 0 : i64, tpu.core_type = #tpu.core_type<tc>} {
    %c0 = arith.constant 0 : index
    %c0_0 = arith.constant 0 : index
    %0 = vector.load %arg0[%c0, %c0_0] : memref<128x128xf32, #tpu.memory_space<vmem>>, vector<128x128xf32>
    %1 = arith.truncf %0 : vector<128x128xf32> to vector<128x128xbf16>
    %c0_1 = arith.constant 0 : index
    %c0_2 = arith.constant 0 : index
    %2 = vector.load %arg1[%c0_1, %c0_2] : memref<128x128xf32, #tpu.memory_space<vmem>>, vector<128x128xf32>
    %3 = arith.truncf %2 : vector<128x128xf32> to vector<128x128xbf16>
    %c0_3 = arith.constant 0 : index
    %c0_4 = arith.constant 0 : index
    %4 = vector.load %arg2[%c0_3, %c0_4] : memref<128x128xf32, #tpu.memory_space<vmem>>, vector<128x128xf32>
    %5 = arith.truncf %4 : vector<128x128xf32> to vector<128x128xbf16>
    %cst = arith.constant dense<0.000000e+00> : vector<128x128xf32>
    %6 = tpu.matmul %3, %5, %cst {dimension_numbers = #tpu.dot_dimension_numbers<[1], [0], [0], [1], [0, 0, 1, 1], [], []>} : vector<128x128xbf16>, vector<128x128xbf16>, vector<128x128xf32> -> vector<128x128xf32>
    %7 = arith.truncf %6 : vector<128x128xf32> to vector<128x128xbf16>
    %cst_5 = arith.constant dense<0.000000e+00> : vector<128x128xf32>
    %8 = tpu.matmul %1, %7, %cst_5 {dimension_numbers = #tpu.dot_dimension_numbers<[1], [0], [0], [1], [0, 0, 1, 1], [], []>} : vector<128x128xbf16>, vector<128x128xbf16>, vector<128x128xf32> -> vector<128x128xf32>
    %c0_6 = arith.constant 0 : index
    %c0_7 = arith.constant 0 : index
    %9 = vector.load %arg3[%c0_6, %c0_7] : memref<1x128xf32, #tpu.memory_space<vmem>>, vector<1x128xf32>
    %10 = vector.broadcast %9 : vector<1x128xf32> to vector<128x128xf32>
    %11 = arith.addf %8, %10 : vector<128x128xf32>
    %cst_8 = arith.constant 0.000000e+00 : f32
    %12 = vector.broadcast %cst_8 : f32 to vector<128x128xf32>
    %13 = arith.maximumf %11, %12 : vector<128x128xf32>
    %14 = arith.truncf %13 : vector<128x128xf32> to vector<128x128xbf16>
    %c0_9 = arith.constant 0 : index
    %c0_10 = arith.constant 0 : index
    %15 = vector.load %arg4[%c0_9, %c0_10] : memref<128x128xf32, #tpu.memory_space<vmem>>, vector<128x128xf32>
    %16 = arith.truncf %15 : vector<128x128xf32> to vector<128x128xbf16>
    %cst_11 = arith.constant dense<0.000000e+00> : vector<128x128xf32>
    %17 = tpu.matmul %14, %16, %cst_11 {dimension_numbers = #tpu.dot_dimension_numbers<[1], [0], [0], [1], [0, 0, 1, 1], [], []>} : vector<128x128xbf16>, vector<128x128xbf16>, vector<128x128xf32> -> vector<128x128xf32>
    %18 = arith.truncf %17 : vector<128x128xf32> to vector<128x128xbf16>
    %cst_12 = arith.constant dense<0.000000e+00> : vector<128x128xf32>
    %19 = tpu.matmul %1, %18, %cst_12 {dimension_numbers = #tpu.dot_dimension_numbers<[1], [0], [0], [1], [0, 0, 1, 1], [], []>} : vector<128x128xbf16>, vector<128x128xbf16>, vector<128x128xf32> -> vector<128x128xf32>
    %c0_13 = arith.constant 0 : index
    %c0_14 = arith.constant 0 : index
    %20 = vector.load %arg5[%c0_13, %c0_14] : memref<1x128xf32, #tpu.memory_space<vmem>>, vector<1x128xf32>
    %21 = vector.broadcast %20 : vector<1x128xf32> to vector<128x128xf32>
    %22 = arith.addf %19, %21 : vector<128x128xf32>
    %23 = tpu.iota {dimensions = array<i32: 1>} : vector<128x128xi32>
    %c0_15 = arith.constant 0 : index
    %c0_16 = arith.constant 0 : index
    %24 = vector.load %arg8[%c0_15, %c0_16] : memref<128x1xi32, #tpu.memory_space<vmem>>, vector<128x1xi32>
    %25 = vector.broadcast %24 : vector<128x1xi32> to vector<128x128xi32>
    %26 = arith.cmpi eq, %25, %23 : vector<128x128xi32>
    %27 = arith.extui %26 : vector<128x128xi1> to vector<128x128xi32>
    %28 = arith.sitofp %27 : vector<128x128xi32> to vector<128x128xf32>
    %c0_17 = arith.constant 0 : index
    %c0_18 = arith.constant 0 : index
    %29 = vector.load %arg9[%c0_17, %c0_18] : memref<128x1xi32, #tpu.memory_space<vmem>>, vector<128x1xi32>
    %30 = vector.broadcast %29 : vector<128x1xi32> to vector<128x128xi32>
    %31 = arith.cmpi eq, %30, %23 : vector<128x128xi32>
    %32 = arith.extui %31 : vector<128x128xi1> to vector<128x128xi32>
    %33 = arith.sitofp %32 : vector<128x128xi32> to vector<128x128xf32>
    %cst_19 = arith.constant dense<0.000000e+00> : vector<128x128xf32>
    %34 = tpu.matmul %28, %22, %cst_19 {dimension_numbers = #tpu.dot_dimension_numbers<[1], [0], [0], [1], [0, 0, 1, 1], [], []>} : vector<128x128xf32>, vector<128x128xf32>, vector<128x128xf32> -> vector<128x128xf32>
    %cst_20 = arith.constant dense<0.000000e+00> : vector<128x128xf32>
    %35 = tpu.matmul %33, %22, %cst_20 {dimension_numbers = #tpu.dot_dimension_numbers<[1], [0], [0], [1], [0, 0, 1, 1], [], []>} : vector<128x128xf32>, vector<128x128xf32>, vector<128x128xf32> -> vector<128x128xf32>
    %c0_21 = arith.constant 0 : index
    %c0_22 = arith.constant 0 : index
    %36 = vector.load %arg6[%c0_21, %c0_22] : memref<128x128xf32, #tpu.memory_space<vmem>>, vector<128x128xf32>
    %cst_23 = arith.constant dense<0.000000e+00> : vector<128x128xf32>
    %37 = tpu.matmul %34, %36, %cst_23 {dimension_numbers = #tpu.dot_dimension_numbers<[1], [0], [0], [1], [0, 0, 1, 1], [], []>} : vector<128x128xf32>, vector<128x128xf32>, vector<128x128xf32> -> vector<128x128xf32>
    %cst_24 = arith.constant dense<0.000000e+00> : vector<128x128xf32>
    %38 = tpu.matmul %37, %35, %cst_24 {dimension_numbers = #tpu.dot_dimension_numbers<[1], [1], [0], [0], [0, 0, 1, 0], [], []>} : vector<128x128xf32>, vector<128x128xf32>, vector<128x128xf32> -> vector<128x128xf32>
    %39 = tpu.iota {dimensions = array<i32: 0>} : vector<128x128xi32>
    %40 = tpu.iota {dimensions = array<i32: 1>} : vector<128x128xi32>
    %41 = arith.cmpi eq, %39, %40 : vector<128x128xi32>
    %cst_25 = arith.constant 0.000000e+00 : f32
    %42 = vector.broadcast %cst_25 : f32 to vector<128x128xf32>
    %43 = arith.select %41, %38, %42 : vector<128x128xi1>, vector<128x128xf32>
    %cst_26 = arith.constant dense<0.000000e+00> : vector<128xf32>
    %44 = vector.multi_reduction <add>, %43, %cst_26 [0] : vector<128x128xf32> to vector<128xf32>
    %45 = vector.shape_cast %44 : vector<128xf32> to vector<1x128xf32>
    %c0_27 = arith.constant 0 : index
    %c0_28 = arith.constant 0 : index
    %46 = memref.load %arg7[%c0_27, %c0_28] : memref<1x1xf32, #tpu.memory_space<smem>>
    %47 = vector.broadcast %46 : f32 to vector<1x128xf32>
    %48 = arith.addf %45, %47 : vector<1x128xf32>
    %49 = arith.negf %48 : vector<1x128xf32>
    %50 = math.exp %49 : vector<1x128xf32>
    %cst_29 = arith.constant 1.000000e+00 : f32
    %51 = vector.broadcast %cst_29 : f32 to vector<1x128xf32>
    %52 = arith.addf %51, %50 : vector<1x128xf32>
    %53 = arith.divf %51, %52 : vector<1x128xf32>
    %c0_30 = arith.constant 0 : index
    %c0_31 = arith.constant 0 : index
    %54 = vector.load %arg10[%c0_30, %c0_31] : memref<1x128xf32, #tpu.memory_space<vmem>>, vector<1x128xf32>
    tpu.vector_store %arg10[%c0_30, %c0_31], %53 {strides = array<i32>} : memref<1x128xf32, #tpu.memory_space<vmem>>, vector<1x128xf32>,
    return
  }
}

</mosaic_0001>

<llo_original>
// kernel: tpu_custom_call.1
$region0: #{tpu_custom_call.1}
  #allocation0 [shape = 'u32[]', space=smem, size = 0x4, offset = 0x4, fixed_abs, tag = 'smem constant byte address 0x4 - core index']
  #allocation1 [shape = 'u32[72,128]{1,0:T(1,128)}', space=vmem, size = 0x9000, scoped, tag = 'internal scratch']
  #allocation2 [shape = 'f32[1,1]{1,0:T(1,128)S(6)}', space=smem, size = 0x200, scoped, tag = 'scoped memory for tpu_custom_call.1']
  %s0 = inlined_call_operand.vmem [shape: f32[128,128], index: 0, kind: input, shape index: {}]
  %s1 = inlined_call_operand.vmem [shape: f32[128,128], index: 1, kind: input, shape index: {}]
  %s2 = inlined_call_operand.hbm [shape: f32[128,128], index: 2, kind: input, shape index: {}]
  %s3 = inlined_call_operand.vmem [shape: f32[1,128], index: 3, kind: input, shape index: {}]
  %s4 = inlined_call_operand.hbm [shape: f32[128,128], index: 4, kind: input, shape index: {}]
  %s5 = inlined_call_operand.vmem [shape: f32[1,128], index: 5, kind: input, shape index: {}]
  %s6 = inlined_call_operand.hbm [shape: f32[128,128], index: 6, kind: input, shape index: {}]
  %s7 = inlined_call_operand.<no memory space> [shape: f32[1,1], index: 7, kind: input, shape index: {}]
  %s8 = inlined_call_operand.vmem [shape: s32[128,1], index: 8, kind: input, shape index: {}]
  %s9 = inlined_call_operand.vmem [shape: s32[128,1], index: 9, kind: input, shape index: {}]
  %s10 = inlined_call_operand.hbm [shape: f32[1,128], index: 10, kind: output, shape index: {}]
  %s11 = sld [smem:[#allocation0]]
  $region62: #{tpu_custom_call.1} parent=0
    _
  %s13 = ssub.s32 1, %s11
  %s14 = scalar_select 0, %s13, %s11
  %15 = sst [smem:[#allocation2]] %s7
  $region1: #{tpu_custom_call.1} parent=0
    #allocation3 [shape = 'u8[65536]{0}', space=vmem, size = 0x10000, scoped, tag = 'input window, operand 2, single buffered']
    #allocation4 [shape = 's32[1]{0}', space=sflag, size = 0x4, scoped, tag = 'scoped memory for tpu_custom_call.1']
    #allocation5 [shape = 's32[1]{0}', space=sflag, size = 0x4, scoped, tag = 'scoped memory for tpu_custom_call.1']
    #allocation6 [shape = 'u8[65536]{0}', space=vmem, size = 0x10000, scoped, tag = 'input window, operand 4, single buffered']
    #allocation7 [shape = 's32[1]{0}', space=sflag, size = 0x4, scoped, tag = 'scoped memory for tpu_custom_call.1']
    #allocation8 [shape = 'u8[65536]{0}', space=vmem, size = 0x10000, scoped, tag = 'input window, operand 6, single buffered']
    #allocation9 [shape = 'u8[512]{0}', space=vmem, size = 0x400, scoped, tag = 'output window, operand 0, single buffered']
    %16 = vsyncpa [#allocation4], 0
    %17 = vsyncpa [#allocation7], 0
    %18 = vsyncpa [#allocation5], 0
    // Predicated region
    $region2: #{tpu_custom_call.1} parent=1 // pred_check
      _
    $region3: #{tpu_custom_call.1} parent=1 // pred_check_branch
      %20 = sbr.rel (0) target = $region5
    $region4: #{tpu_custom_call.1} parent=1 // pred_region
      _
    $region5: #{tpu_custom_call.1} parent=1 // pred_fallthru
      _
    // Predicated region
    $region6: #{tpu_custom_call.1} parent=1 // pred_check
      _
    $region7: #{tpu_custom_call.1} parent=1 // pred_check_branch
      %22 = sbr.rel (0) target = $region9
    $region8: #{tpu_custom_call.1} parent=1 // pred_region
      _
    $region9: #{tpu_custom_call.1} parent=1 // pred_fallthru
      _
    // Predicated region
    $region10: #{tpu_custom_call.1} parent=1 // pred_check
      _
    $region11: #{tpu_custom_call.1} parent=1 // pred_check_branch
      %24 = sbr.rel (0) target = $region13
    $region12: #{tpu_custom_call.1} parent=1 // pred_region
      %26 = vsyncadd [#allocation4], 0
      %s27 = sshll.u32 %s2, 4
      %s28 = int_to_ptr.hbm [resolvable:$true] %s27
      %s29 = sshll.u32 [#allocation3], 4
      %s30 = int_to_ptr.vmem [resolvable:$true] %s29
      %35 = dma.hbm_to_vmem [thread:$0]  %s28, 2048, %s30, [#allocation4], 128, 128, 8
    $region13: #{tpu_custom_call.1} parent=1 // pred_fallthru
      _
    // Predicated region
    $region14: #{tpu_custom_call.1} parent=1 // pred_check
      _
    $region15: #{tpu_custom_call.1} parent=1 // pred_check_branch
      %37 = sbr.rel (0) target = $region17
    $region16: #{tpu_custom_call.1} parent=1 // pred_region
      _
    $region17: #{tpu_custom_call.1} parent=1 // pred_fallthru
      _
    // Predicated region
    $region18: #{tpu_custom_call.1} parent=1 // pred_check
      _
    $region19: #{tpu_custom_call.1} parent=1 // pred_check_branch
      %39 = sbr.rel (0) target = $region21
    $region20: #{tpu_custom_call.1} parent=1 // pred_region
      %41 = vsyncadd [#allocation7], 0
      %s42 = sshll.u32 %s4, 4
      %s43 = int_to_ptr.hbm [resolvable:$true] %s42
      %s44 = sshll.u32 [#allocation6], 4
      %s45 = int_to_ptr.vmem [resolvable:$true] %s44
      %50 = dma.hbm_to_vmem [thread:$0]  %s43, 2048, %s45, [#allocation7], 128, 128, 8
    $region21: #{tpu_custom_call.1} parent=1 // pred_fallthru
      _
    // Predicated region
    $region22: #{tpu_custom_call.1} parent=1 // pred_check
      _
    $region23: #{tpu_custom_call.1} parent=1 // pred_check_branch
      %52 = sbr.rel (0) target = $region25
    $region24: #{tpu_custom_call.1} parent=1 // pred_region
      _
    $region25: #{tpu_custom_call.1} parent=1 // pred_fallthru
      _
    // Predicated region
    $region26: #{tpu_custom_call.1} parent=1 // pred_check
      _
    $region27: #{tpu_custom_call.1} parent=1 // pred_check_branch
      %54 = sbr.rel (0) target = $region29
    $region28: #{tpu_custom_call.1} parent=1 // pred_region
      %56 = vsyncadd [#allocation7], 0
      %s57 = sshll.u32 %s6, 4
      %s58 = int_to_ptr.hbm [resolvable:$true] %s57
      %s59 = sshll.u32 [#allocation8], 4
      %s60 = int_to_ptr.vmem [resolvable:$true] %s59
      %65 = dma.hbm_to_vmem [thread:$0]  %s58, 2048, %s60, [#allocation7], 128, 128, 8
    $region29: #{tpu_custom_call.1} parent=1 // pred_fallthru
      _
    // Predicated region
    $region30: #{tpu_custom_call.1} parent=1 // pred_check
      _
    $region31: #{tpu_custom_call.1} parent=1 // pred_check_branch
      %67 = sbr.rel (0) target = $region33
    $region32: #{tpu_custom_call.1} parent=1 // pred_region
      _
    $region33: #{tpu_custom_call.1} parent=1 // pred_fallthru
      _
    // Predicated region
    $region34: #{tpu_custom_call.1} parent=1 // pred_check
      _
    $region35: #{tpu_custom_call.1} parent=1 // pred_check_branch
      %69 = sbr.rel (0) target = $region37
    $region36: #{tpu_custom_call.1} parent=1 // pred_region
      _
    $region37: #{tpu_custom_call.1} parent=1 // pred_fallthru
      _
    // Predicated region
    $region38: #{tpu_custom_call.1} parent=1 // pred_check
      _
    $region39: #{tpu_custom_call.1} parent=1 // pred_check_branch
      %71 = sbr.rel (0) target = $region41
    $region40: #{tpu_custom_call.1} parent=1 // pred_region
      _
    $region41: #{tpu_custom_call.1} parent=1 // pred_fallthru
      _
    // Predicated region
    $region42: #{tpu_custom_call.1} parent=1 // pred_check
      _
    $region43: #{tpu_custom_call.1} parent=1 // pred_check_branch
      %73 = sbr.rel (0) target = $region45
    $region44: #{tpu_custom_call.1} parent=1 // pred_region
      %75 = dma.done [#allocation4], 2048
    $region45: #{tpu_custom_call.1} parent=1 // pred_fallthru
      _
    // Predicated region
    $region46: #{tpu_custom_call.1} parent=1 // pred_check
      _
    $region47: #{tpu_custom_call.1} parent=1 // pred_check_branch
      %77 = sbr.rel (0) target = $region49
    $region48: #{tpu_custom_call.1} parent=1 // pred_region
      %79 = dma.done [#allocation7], 2048
    $region49: #{tpu_custom_call.1} parent=1 // pred_fallthru
      _
    // Predicated region
    $region50: #{tpu_custom_call.1} parent=1 // pred_check
      _
    $region51: #{tpu_custom_call.1} parent=1 // pred_check_branch
      %81 = sbr.rel (0) target = $region53
    $region52: #{tpu_custom_call.1} parent=1 // pred_region
      %83 = dma.done [#allocation7], 2048
    $region53: #{tpu_custom_call.1} parent=1 // pred_fallthru
      _
    %v84 = vld [vmem:[%s0] sm:$0xff]
    %v85 = vld [vmem:[%s0 + $0x8] sm:$0xff]
    %v86 = vld [vmem:[%s0 + $0x10] sm:$0xff]
    %v87 = vld [vmem:[%s0 + $0x18] sm:$0xff]
    %v88 = vld [vmem:[%s0 + $0x20] sm:$0xff]
    %v89 = vld [vmem:[%s0 + $0x28] sm:$0xff]
    %v90 = vld [vmem:[%s0 + $0x30] sm:$0xff]
    %v91 = vld [vmem:[%s0 + $0x38] sm:$0xff]
    %v92 = vld [vmem:[%s0 + $0x40] sm:$0xff]
    %v93 = vld [vmem:[%s0 + $0x48] sm:$0xff]
    %v94 = vld [vmem:[%s0 + $0x50] sm:$0xff]
    %v95 = vld [vmem:[%s0 + $0x58] sm:$0xff]
    %v96 = vld [vmem:[%s0 + $0x60] sm:$0xff]
    %v97 = vld [vmem:[%s0 + $0x68] sm:$0xff]
    %v98 = vld [vmem:[%s0 + $0x70] sm:$0xff]
    %v99 = vld [vmem:[%s0 + $0x78] sm:$0xff]
    %v100 = vpack.c.bf16 %v85, %v84
    %v101 = vpack.c.bf16 %v87, %v86
    %v102 = vpack.c.bf16 %v89, %v88
    %v103 = vpack.c.bf16 %v91, %v90
    %v104 = vpack.c.bf16 %v93, %v92
    %v105 = vpack.c.bf16 %v95, %v94
    %v106 = vpack.c.bf16 %v97, %v96
    %v107 = vpack.c.bf16 %v99, %v98
    %v108 = vld [vmem:[%s1] sm:$0xff]
    %v109 = vld [vmem:[%s1 + $0x8] sm:$0xff]
    %v110 = vld [vmem:[%s1 + $0x10] sm:$0xff]
    %v111 = vld [vmem:[%s1 + $0x18] sm:$0xff]
    %v112 = vld [vmem:[%s1 + $0x20] sm:$0xff]
    %v113 = vld [vmem:[%s1 + $0x28] sm:$0xff]
    %v114 = vld [vmem:[%s1 + $0x30] sm:$0xff]
    %v115 = vld [vmem:[%s1 + $0x38] sm:$0xff]
    %v116 = vld [vmem:[%s1 + $0x40] sm:$0xff]
    %v117 = vld [vmem:[%s1 + $0x48] sm:$0xff]
    %v118 = vld [vmem:[%s1 + $0x50] sm:$0xff]
    %v119 = vld [vmem:[%s1 + $0x58] sm:$0xff]
    %v120 = vld [vmem:[%s1 + $0x60] sm:$0xff]
    %v121 = vld [vmem:[%s1 + $0x68] sm:$0xff]
    %v122 = vld [vmem:[%s1 + $0x70] sm:$0xff]
    %v123 = vld [vmem:[%s1 + $0x78] sm:$0xff]
    %v124 = vpack.c.bf16 %v109, %v108
    %v125 = vpack.c.bf16 %v111, %v110
    %v126 = vpack.c.bf16 %v113, %v112
    %v127 = vpack.c.bf16 %v115, %v114
    %v128 = vpack.c.bf16 %v117, %v116
    %v129 = vpack.c.bf16 %v119, %v118
    %v130 = vpack.c.bf16 %v121, %v120
    %v131 = vpack.c.bf16 %v123, %v122
    %v132 = vld [vmem:[#allocation3] sm:$0xff]
    %v133 = vld [vmem:[#allocation3 + $0x8] sm:$0xff]
    %v134 = vld [vmem:[#allocation3 + $0x10] sm:$0xff]
    %v135 = vld [vmem:[#allocation3 + $0x18] sm:$0xff]
    %v136 = vld [vmem:[#allocation3 + $0x20] sm:$0xff]
    %v137 = vld [vmem:[#allocation3 + $0x28] sm:$0xff]
    %v138 = vld [vmem:[#allocation3 + $0x30] sm:$0xff]
    %v139 = vld [vmem:[#allocation3 + $0x38] sm:$0xff]
    %v140 = vld [vmem:[#allocation3 + $0x40] sm:$0xff]
    %v141 = vld [vmem:[#allocation3 + $0x48] sm:$0xff]
    %v142 = vld [vmem:[#allocation3 + $0x50] sm:$0xff]
    %v143 = vld [vmem:[#allocation3 + $0x58] sm:$0xff]
    %v144 = vld [vmem:[#allocation3 + $0x60] sm:$0xff]
    %v145 = vld [vmem:[#allocation3 + $0x68] sm:$0xff]
    %v146 = vld [vmem:[#allocation3 + $0x70] sm:$0xff]
    %v147 = vld [vmem:[#allocation3 + $0x78] sm:$0xff]
    %v148 = vpack.c.bf16 %v133, %v132
    %v149 = vpack.c.bf16 %v135, %v134
    %v150 = vpack.c.bf16 %v137, %v136
    %v151 = vpack.c.bf16 %v139, %v138
    %v152 = vpack.c.bf16 %v141, %v140
    %v153 = vpack.c.bf16 %v143, %v142
    %v154 = vpack.c.bf16 %v145, %v144
    %v155 = vpack.c.bf16 %v147, %v146
    %156 = vmatpush.bf16.msra.mxu0 %v155
    %157 = vmatpush.bf16.msra.mxu0 %v154
    %158 = vmatpush.bf16.msra.mxu0 %v153
    %159 = vmatpush.bf16.msra.mxu0 %v152
    %160 = vmatpush.bf16.msra.mxu0 %v151
    %161 = vmatpush.bf16.msra.mxu0 %v150
    %162 = vmatpush.bf16.msra.mxu0 %v149
    %163 = vmatpush.bf16.msra.mxu0 %v148
    %164 = vmatmul.bf16.gmra.mxu0 %v124
    %v165 = vpop.f32.mrf.mxu0
    %v166 = vadd.f32 0.0, %v165
    %v167 = vpop.f32.mrf.mxu0
    %v168 = vadd.f32 0.0, %v167
    %169 = vmatmul.bf16.gmra.mxu0 %v125
    %v170 = vpop.f32.mrf.mxu0
    %v171 = vadd.f32 0.0, %v170
    %v172 = vpop.f32.mrf.mxu0
    %v173 = vadd.f32 0.0, %v172
    %174 = vmatmul.bf16.gmra.mxu0 %v126
    %v175 = vpop.f32.mrf.mxu0
    %v176 = vadd.f32 0.0, %v175
    %v177 = vpop.f32.mrf.mxu0
    %v178 = vadd.f32 0.0, %v177
    %179 = vmatmul.bf16.gmra.mxu0 %v127
    %v180 = vpop.f32.mrf.mxu0
    %v181 = vadd.f32 0.0, %v180
    %v182 = vpop.f32.mrf.mxu0
    %v183 = vadd.f32 0.0, %v182
    %184 = vmatmul.bf16.gmra.mxu0 %v128
    %v185 = vpop.f32.mrf.mxu0
    %v186 = vadd.f32 0.0, %v185
    %v187 = vpop.f32.mrf.mxu0
    %v188 = vadd.f32 0.0, %v187
    %189 = vmatmul.bf16.gmra.mxu0 %v129
    %v190 = vpop.f32.mrf.mxu0
    %v191 = vadd.f32 0.0, %v190
    %v192 = vpop.f32.mrf.mxu0
    %v193 = vadd.f32 0.0, %v192
    %194 = vmatmul.bf16.gmra.mxu0 %v130
    %v195 = vpop.f32.mrf.mxu0
    %v196 = vadd.f32 0.0, %v195
    %v197 = vpop.f32.mrf.mxu0
    %v198 = vadd.f32 0.0, %v197
    %199 = vmatmul.bf16.gmra.mxu0 %v131
    %v200 = vpop.f32.mrf.mxu0
    %v201 = vadd.f32 0.0, %v200
    %v202 = vpop.f32.mrf.mxu0
    %v203 = vadd.f32 0.0, %v202
    %204 = vdwg.mxu0
    %v205 = vpack.c.bf16 %v168, %v166
    %v206 = vpack.c.bf16 %v173, %v171
    %v207 = vpack.c.bf16 %v178, %v176
    %v208 = vpack.c.bf16 %v183, %v181
    %v209 = vpack.c.bf16 %v188, %v186
    %v210 = vpack.c.bf16 %v193, %v191
    %v211 = vpack.c.bf16 %v198, %v196
    %v212 = vpack.c.bf16 %v203, %v201
    %v213 = vld [vmem:[%s3] sm:$0x1]
    %v215 = vperm.slane %v213, 0
    %217 = vmatpush.bf16.msra.mxu0 %v212
    %218 = vmatpush.bf16.msra.mxu0 %v211
    %219 = vmatpush.bf16.msra.mxu0 %v210
    %220 = vmatpush.bf16.msra.mxu0 %v209
    %221 = vmatpush.bf16.msra.mxu0 %v208
    %222 = vmatpush.bf16.msra.mxu0 %v207
    %223 = vmatpush.bf16.msra.mxu0 %v206
    %224 = vmatpush.bf16.msra.mxu0 %v205
    %225 = vmatmul.bf16.gmra.mxu0 %v100
    %v226 = vpop.f32.mrf.mxu0
    %v227 = vadd.f32 %v215, %v226
    %v228 = vpop.f32.mrf.mxu0
    %v229 = vadd.f32 %v215, %v228
    %230 = vmatmul.bf16.gmra.mxu0 %v101
    %v231 = vpop.f32.mrf.mxu0
    %v232 = vadd.f32 %v215, %v231
    %v233 = vpop.f32.mrf.mxu0
    %v234 = vadd.f32 %v215, %v233
    %235 = vmatmul.bf16.gmra.mxu0 %v102
    %v236 = vpop.f32.mrf.mxu0
    %v237 = vadd.f32 %v215, %v236
    %v238 = vpop.f32.mrf.mxu0
    %v239 = vadd.f32 %v215, %v238
    %240 = vmatmul.bf16.gmra.mxu0 %v103
    %v241 = vpop.f32.mrf.mxu0
    %v242 = vadd.f32 %v215, %v241
    %v243 = vpop.f32.mrf.mxu0
    %v244 = vadd.f32 %v215, %v243
    %245 = vmatmul.bf16.gmra.mxu0 %v104
    %v246 = vpop.f32.mrf.mxu0
    %v247 = vadd.f32 %v215, %v246
    %v248 = vpop.f32.mrf.mxu0
    %v249 = vadd.f32 %v215, %v248
    %250 = vmatmul.bf16.gmra.mxu0 %v105
    %v251 = vpop.f32.mrf.mxu0
    %v252 = vadd.f32 %v215, %v251
    %v253 = vpop.f32.mrf.mxu0
    %v254 = vadd.f32 %v215, %v253
    %255 = vmatmul.bf16.gmra.mxu0 %v106
    %v256 = vpop.f32.mrf.mxu0
    %v257 = vadd.f32 %v215, %v256
    %v258 = vpop.f32.mrf.mxu0
    %v259 = vadd.f32 %v215, %v258
    %260 = vmatmul.bf16.gmra.mxu0 %v107
    %v261 = vpop.f32.mrf.mxu0
    %v262 = vadd.f32 %v215, %v261
    %v263 = vpop.f32.mrf.mxu0
    %v264 = vadd.f32 %v215, %v263
    %265 = vdwg.mxu0
    %v266 = vmax.f32 %v227, 0.0
    %v267 = vmax.f32 %v229, 0.0
    %v268 = vmax.f32 %v232, 0.0
    %v269 = vmax.f32 %v234, 0.0
    %v270 = vmax.f32 %v237, 0.0
    %v271 = vmax.f32 %v239, 0.0
    %v272 = vmax.f32 %v242, 0.0
    %v273 = vmax.f32 %v244, 0.0
    %v274 = vmax.f32 %v247, 0.0
    %v275 = vmax.f32 %v249, 0.0
    %v276 = vmax.f32 %v252, 0.0
    %v277 = vmax.f32 %v254, 0.0
    %v278 = vmax.f32 %v257, 0.0
    %v279 = vmax.f32 %v259, 0.0
    %v280 = vmax.f32 %v262, 0.0
    %v281 = vmax.f32 %v264, 0.0
    %v282 = vpack.c.bf16 %v267, %v266
    %v283 = vpack.c.bf16 %v269, %v268
    %v284 = vpack.c.bf16 %v271, %v270
    %v285 = vpack.c.bf16 %v273, %v272
    %v286 = vpack.c.bf16 %v275, %v274
    %v287 = vpack.c.bf16 %v277, %v276
    %v288 = vpack.c.bf16 %v279, %v278
    %v289 = vpack.c.bf16 %v281, %v280
    %v290 = vld [vmem:[#allocation6] sm:$0xff]
    %v291 = vld [vmem:[#allocation6 + $0x8] sm:$0xff]
    %v292 = vld [vmem:[#allocation6 + $0x10] sm:$0xff]
    %v293 = vld [vmem:[#allocation6 + $0x18] sm:$0xff]
    %v294 = vld [vmem:[#allocation6 + $0x20] sm:$0xff]
    %v295 = vld [vmem:[#allocation6 + $0x28] sm:$0xff]
    %v296 = vld [vmem:[#allocation6 + $0x30] sm:$0xff]
    %v297 = vld [vmem:[#allocation6 + $0x38] sm:$0xff]
    %v298 = vld [vmem:[#allocation6 + $0x40] sm:$0xff]
    %v299 = vld [vmem:[#allocation6 + $0x48] sm:$0xff]
    %v300 = vld [vmem:[#allocation6 + $0x50] sm:$0xff]
    %v301 = vld [vmem:[#allocation6 + $0x58] sm:$0xff]
    %v302 = vld [vmem:[#allocation6 + $0x60] sm:$0xff]
    %v303 = vld [vmem:[#allocation6 + $0x68] sm:$0xff]
    %v304 = vld [vmem:[#allocation6 + $0x70] sm:$0xff]
    %v305 = vld [vmem:[#allocation6 + $0x78] sm:$0xff]
    %v306 = vpack.c.bf16 %v291, %v290
    %v307 = vpack.c.bf16 %v293, %v292
    %v308 = vpack.c.bf16 %v295, %v294
    %v309 = vpack.c.bf16 %v297, %v296
    %v310 = vpack.c.bf16 %v299, %v298
    %v311 = vpack.c.bf16 %v301, %v300
    %v312 = vpack.c.bf16 %v303, %v302
    %v313 = vpack.c.bf16 %v305, %v304
    %314 = vmatpush.bf16.msra.mxu0 %v313
    %315 = vmatpush.bf16.msra.mxu0 %v312
    %316 = vmatpush.bf16.msra.mxu0 %v311
    %317 = vmatpush.bf16.msra.mxu0 %v310
    %318 = vmatpush.bf16.msra.mxu0 %v309
    %319 = vmatpush.bf16.msra.mxu0 %v308
    %320 = vmatpush.bf16.msra.mxu0 %v307
    %321 = vmatpush.bf16.msra.mxu0 %v306
    %322 = vmatmul.bf16.gmra.mxu0 %v282
    %v323 = vpop.f32.mrf.mxu0
    %v324 = vadd.f32 0.0, %v323
    %v325 = vpop.f32.mrf.mxu0
    %v326 = vadd.f32 0.0, %v325
    %327 = vmatmul.bf16.gmra.mxu0 %v283
    %v328 = vpop.f32.mrf.mxu0
    %v329 = vadd.f32 0.0, %v328
    %v330 = vpop.f32.mrf.mxu0
    %v331 = vadd.f32 0.0, %v330
    %332 = vmatmul.bf16.gmra.mxu0 %v284
    %v333 = vpop.f32.mrf.mxu0
    %v334 = vadd.f32 0.0, %v333
    %v335 = vpop.f32.mrf.mxu0
    %v336 = vadd.f32 0.0, %v335
    %337 = vmatmul.bf16.gmra.mxu0 %v285
    %v338 = vpop.f32.mrf.mxu0
    %v339 = vadd.f32 0.0, %v338
    %v340 = vpop.f32.mrf.mxu0
    %v341 = vadd.f32 0.0, %v340
    %342 = vmatmul.bf16.gmra.mxu0 %v286
    %v343 = vpop.f32.mrf.mxu0
    %v344 = vadd.f32 0.0, %v343
    %v345 = vpop.f32.mrf.mxu0
    %v346 = vadd.f32 0.0, %v345
    %347 = vmatmul.bf16.gmra.mxu0 %v287
    %v348 = vpop.f32.mrf.mxu0
    %v349 = vadd.f32 0.0, %v348
    %v350 = vpop.f32.mrf.mxu0
    %v351 = vadd.f32 0.0, %v350
    %352 = vmatmul.bf16.gmra.mxu0 %v288
    %v353 = vpop.f32.mrf.mxu0
    %v354 = vadd.f32 0.0, %v353
    %v355 = vpop.f32.mrf.mxu0
    %v356 = vadd.f32 0.0, %v355
    %357 = vmatmul.bf16.gmra.mxu0 %v289
    %v358 = vpop.f32.mrf.mxu0
    %v359 = vadd.f32 0.0, %v358
    %v360 = vpop.f32.mrf.mxu0
    %v361 = vadd.f32 0.0, %v360
    %362 = vdwg.mxu0
    %v363 = vpack.c.bf16 %v326, %v324
    %v364 = vpack.c.bf16 %v331, %v329
    %v365 = vpack.c.bf16 %v336, %v334
    %v366 = vpack.c.bf16 %v341, %v339
    %v367 = vpack.c.bf16 %v346, %v344
    %v368 = vpack.c.bf16 %v351, %v349
    %v369 = vpack.c.bf16 %v356, %v354
    %v370 = vpack.c.bf16 %v361, %v359
    %v371 = vld [vmem:[%s5] sm:$0x1]
    %v373 = vperm.slane %v371, 0
    %375 = vmatpush.bf16.msra.mxu0 %v370
    %376 = vmatpush.bf16.msra.mxu0 %v369
    %377 = vmatpush.bf16.msra.mxu0 %v368
    %378 = vmatpush.bf16.msra.mxu0 %v367
    %379 = vmatpush.bf16.msra.mxu0 %v366
    %380 = vmatpush.bf16.msra.mxu0 %v365
    %381 = vmatpush.bf16.msra.mxu0 %v364
    %382 = vmatpush.bf16.msra.mxu0 %v363
    %383 = vmatmul.bf16.gmra.mxu0 %v100
    %v384 = vpop.f32.mrf.mxu0
    %v385 = vadd.f32 %v373, %v384
    %v386 = vpop.f32.mrf.mxu0
    %v387 = vadd.f32 %v373, %v386
    %388 = vmatmul.bf16.gmra.mxu0 %v101
    %v389 = vpop.f32.mrf.mxu0
    %v390 = vadd.f32 %v373, %v389
    %v391 = vpop.f32.mrf.mxu0
    %v392 = vadd.f32 %v373, %v391
    %393 = vmatmul.bf16.gmra.mxu0 %v102
    %v394 = vpop.f32.mrf.mxu0
    %v395 = vadd.f32 %v373, %v394
    %v396 = vpop.f32.mrf.mxu0
    %v397 = vadd.f32 %v373, %v396
    %398 = vmatmul.bf16.gmra.mxu0 %v103
    %v399 = vpop.f32.mrf.mxu0
    %v400 = vadd.f32 %v373, %v399
    %v401 = vpop.f32.mrf.mxu0
    %v402 = vadd.f32 %v373, %v401
    %403 = vmatmul.bf16.gmra.mxu0 %v104
    %v404 = vpop.f32.mrf.mxu0
    %v405 = vadd.f32 %v373, %v404
    %v406 = vpop.f32.mrf.mxu0
    %v407 = vadd.f32 %v373, %v406
    %408 = vmatmul.bf16.gmra.mxu0 %v105
    %v409 = vpop.f32.mrf.mxu0
    %v410 = vadd.f32 %v373, %v409
    %v411 = vpop.f32.mrf.mxu0
    %v412 = vadd.f32 %v373, %v411
    %413 = vmatmul.bf16.gmra.mxu0 %v106
    %v414 = vpop.f32.mrf.mxu0
    %v415 = vadd.f32 %v373, %v414
    %v416 = vpop.f32.mrf.mxu0
    %v417 = vadd.f32 %v373, %v416
    %418 = vmatmul.bf16.gmra.mxu0 %v107
    %v419 = vpop.f32.mrf.mxu0
    %v420 = vadd.f32 %v373, %v419
    %v421 = vpop.f32.mrf.mxu0
    %v422 = vadd.f32 %v373, %v421
    %423 = vdwg.mxu0
    %v424 = vlaneseq
    %v425 = vand.u32 %v424, 127
    %v426 = vld [vmem:[%s8] sm:$0xff]
    %v427 = vld [vmem:[%s8 + $0x8] sm:$0xff]
    %v428 = vld [vmem:[%s8 + $0x10] sm:$0xff]
    %v429 = vld [vmem:[%s8 + $0x18] sm:$0xff]
    %v430 = vld [vmem:[%s8 + $0x20] sm:$0xff]
    %v431 = vld [vmem:[%s8 + $0x28] sm:$0xff]
    %v432 = vld [vmem:[%s8 + $0x30] sm:$0xff]
    %v433 = vld [vmem:[%s8 + $0x38] sm:$0xff]
    %v434 = vld [vmem:[%s8 + $0x40] sm:$0xff]
    %v435 = vld [vmem:[%s8 + $0x48] sm:$0xff]
    %v436 = vld [vmem:[%s8 + $0x50] sm:$0xff]
    %v437 = vld [vmem:[%s8 + $0x58] sm:$0xff]
    %v438 = vld [vmem:[%s8 + $0x60] sm:$0xff]
    %v439 = vld [vmem:[%s8 + $0x68] sm:$0xff]
    %v440 = vld [vmem:[%s8 + $0x70] sm:$0xff]
    %v441 = vld [vmem:[%s8 + $0x78] sm:$0xff]
    %442 = vset.pattern.permute.xlu0 0
    %443 = vperm.xlu0 %442, %v426
    %v444 = vpop.permute.xlu0 %443
    %445 = vset.pattern.permute.xlu0 0
    %446 = vperm.xlu0 %445, %v427
    %v447 = vpop.permute.xlu0 %446
    %448 = vset.pattern.permute.xlu0 0
    %449 = vperm.xlu0 %448, %v428
    %v450 = vpop.permute.xlu0 %449
    %451 = vset.pattern.permute.xlu0 0
    %452 = vperm.xlu0 %451, %v429
    %v453 = vpop.permute.xlu0 %452
    %454 = vset.pattern.permute.xlu0 0
    %455 = vperm.xlu0 %454, %v430
    %v456 = vpop.permute.xlu0 %455
    %457 = vset.pattern.permute.xlu0 0
    %458 = vperm.xlu0 %457, %v431
    %v459 = vpop.permute.xlu0 %458
    %460 = vset.pattern.permute.xlu0 0
    %461 = vperm.xlu0 %460, %v432
    %v462 = vpop.permute.xlu0 %461
    %463 = vset.pattern.permute.xlu0 0
    %464 = vperm.xlu0 %463, %v433
    %v465 = vpop.permute.xlu0 %464
    %466 = vset.pattern.permute.xlu0 0
    %467 = vperm.xlu0 %466, %v434
    %v468 = vpop.permute.xlu0 %467
    %469 = vset.pattern.permute.xlu0 0
    %470 = vperm.xlu0 %469, %v435
    %v471 = vpop.permute.xlu0 %470
    %472 = vset.pattern.permute.xlu0 0
    %473 = vperm.xlu0 %472, %v436
    %v474 = vpop.permute.xlu0 %473
    %475 = vset.pattern.permute.xlu0 0
    %476 = vperm.xlu0 %475, %v437
    %v477 = vpop.permute.xlu0 %476
    %478 = vset.pattern.permute.xlu0 0
    %479 = vperm.xlu0 %478, %v438
    %v480 = vpop.permute.xlu0 %479
    %481 = vset.pattern.permute.xlu0 0
    %482 = vperm.xlu0 %481, %v439
    %v483 = vpop.permute.xlu0 %482
    %484 = vset.pattern.permute.xlu0 0
    %485 = vperm.xlu0 %484, %v440
    %v486 = vpop.permute.xlu0 %485
    %487 = vset.pattern.permute.xlu0 0
    %488 = vperm.xlu0 %487, %v441
    %v489 = vpop.permute.xlu0 %488
    %vm490 = vcmp.eq.s32.totalorder %v444, %v425
    %vm491 = vcmp.eq.s32.totalorder %v447, %v425
    %vm492 = vcmp.eq.s32.totalorder %v450, %v425
    %vm493 = vcmp.eq.s32.totalorder %v453, %v425
    %vm494 = vcmp.eq.s32.totalorder %v456, %v425
    %vm495 = vcmp.eq.s32.totalorder %v459, %v425
    %vm496 = vcmp.eq.s32.totalorder %v462, %v425
    %vm497 = vcmp.eq.s32.totalorder %v465, %v425
    %vm498 = vcmp.eq.s32.totalorder %v468, %v425
    %vm499 = vcmp.eq.s32.totalorder %v471, %v425
    %vm500 = vcmp.eq.s32.totalorder %v474, %v425
    %vm501 = vcmp.eq.s32.totalorder %v477, %v425
    %vm502 = vcmp.eq.s32.totalorder %v480, %v425
    %vm503 = vcmp.eq.s32.totalorder %v483, %v425
    %vm504 = vcmp.eq.s32.totalorder %v486, %v425
    %vm505 = vcmp.eq.s32.totalorder %v489, %v425
    %v506 = vsel %vm490, 1, 0
    %v507 = vsel %vm491, 1, 0
    %v508 = vsel %vm492, 1, 0
    %v509 = vsel %vm493, 1, 0
    %v510 = vsel %vm494, 1, 0
    %v511 = vsel %vm495, 1, 0
    %v512 = vsel %vm496, 1, 0
    %v513 = vsel %vm497, 1, 0
    %v514 = vsel %vm498, 1, 0
    %v515 = vsel %vm499, 1, 0
    %v516 = vsel %vm500, 1, 0
    %v517 = vsel %vm501, 1, 0
    %v518 = vsel %vm502, 1, 0
    %v519 = vsel %vm503, 1, 0
    %v520 = vsel %vm504, 1, 0
    %v521 = vsel %vm505, 1, 0
    %v522 = vcvt.s32.f32 %v506
    %v523 = vcvt.s32.f32 %v507
    %v524 = vcvt.s32.f32 %v508
    %v525 = vcvt.s32.f32 %v509
    %v526 = vcvt.s32.f32 %v510
    %v527 = vcvt.s32.f32 %v511
    %v528 = vcvt.s32.f32 %v512
    %v529 = vcvt.s32.f32 %v513
    %v530 = vcvt.s32.f32 %v514
    %v531 = vcvt.s32.f32 %v515
    %v532 = vcvt.s32.f32 %v516
    %v533 = vcvt.s32.f32 %v517
    %v534 = vcvt.s32.f32 %v518
    %v535 = vcvt.s32.f32 %v519
    %v536 = vcvt.s32.f32 %v520
    %v537 = vcvt.s32.f32 %v521
    %v538 = vld [vmem:[%s9] sm:$0xff]
    %v539 = vld [vmem:[%s9 + $0x8] sm:$0xff]
    %v540 = vld [vmem:[%s9 + $0x10] sm:$0xff]
    %v541 = vld [vmem:[%s9 + $0x18] sm:$0xff]
    %v542 = vld [vmem:[%s9 + $0x20] sm:$0xff]
    %v543 = vld [vmem:[%s9 + $0x28] sm:$0xff]
    %v544 = vld [vmem:[%s9 + $0x30] sm:$0xff]
    %v545 = vld [vmem:[%s9 + $0x38] sm:$0xff]
    %v546 = vld [vmem:[%s9 + $0x40] sm:$0xff]
    %v547 = vld [vmem:[%s9 + $0x48] sm:$0xff]
    %v548 = vld [vmem:[%s9 + $0x50] sm:$0xff]
    %v549 = vld [vmem:[%s9 + $0x58] sm:$0xff]
    %v550 = vld [vmem:[%s9 + $0x60] sm:$0xff]
    %v551 = vld [vmem:[%s9 + $0x68] sm:$0xff]
    %v552 = vld [vmem:[%s9 + $0x70] sm:$0xff]
    %v553 = vld [vmem:[%s9 + $0x78] sm:$0xff]
    %554 = vset.pattern.permute.xlu0 0
    %555 = vperm.xlu0 %554, %v538
    %v556 = vpop.permute.xlu0 %555
    %557 = vset.pattern.permute.xlu0 0
    %558 = vperm.xlu0 %557, %v539
    %v559 = vpop.permute.xlu0 %558
    %560 = vset.pattern.permute.xlu0 0
    %561 = vperm.xlu0 %560, %v540
    %v562 = vpop.permute.xlu0 %561
    %563 = vset.pattern.permute.xlu0 0
    %564 = vperm.xlu0 %563, %v541
    %v565 = vpop.permute.xlu0 %564
    %566 = vset.pattern.permute.xlu0 0
    %567 = vperm.xlu0 %566, %v542
    %v568 = vpop.permute.xlu0 %567
    %569 = vset.pattern.permute.xlu0 0
    %570 = vperm.xlu0 %569, %v543
    %v571 = vpop.permute.xlu0 %570
    %572 = vset.pattern.permute.xlu0 0
    %573 = vperm.xlu0 %572, %v544
    %v574 = vpop.permute.xlu0 %573
    %575 = vset.pattern.permute.xlu0 0
    %576 = vperm.xlu0 %575, %v545
    %v577 = vpop.permute.xlu0 %576
    %578 = vset.pattern.permute.xlu0 0
    %579 = vperm.xlu0 %578, %v546
    %v580 = vpop.permute.xlu0 %579
    %581 = vset.pattern.permute.xlu0 0
    %582 = vperm.xlu0 %581, %v547
    %v583 = vpop.permute.xlu0 %582
    %584 = vset.pattern.permute.xlu0 0
    %585 = vperm.xlu0 %584, %v548
    %v586 = vpop.permute.xlu0 %585
    %587 = vset.pattern.permute.xlu0 0
    %588 = vperm.xlu0 %587, %v549
    %v589 = vpop.permute.xlu0 %588
    %590 = vset.pattern.permute.xlu0 0
    %591 = vperm.xlu0 %590, %v550
    %v592 = vpop.permute.xlu0 %591
    %593 = vset.pattern.permute.xlu0 0
    %594 = vperm.xlu0 %593, %v551
    %v595 = vpop.permute.xlu0 %594
    %596 = vset.pattern.permute.xlu0 0
    %597 = vperm.xlu0 %596, %v552
    %v598 = vpop.permute.xlu0 %597
    %599 = vset.pattern.permute.xlu0 0
    %600 = vperm.xlu0 %599, %v553
    %v601 = vpop.permute.xlu0 %600
    %vm602 = vcmp.eq.s32.totalorder %v556, %v425
    %vm603 = vcmp.eq.s32.totalorder %v559, %v425
    %vm604 = vcmp.eq.s32.totalorder %v562, %v425
    %vm605 = vcmp.eq.s32.totalorder %v565, %v425
    %vm606 = vcmp.eq.s32.totalorder %v568, %v425
    %vm607 = vcmp.eq.s32.totalorder %v571, %v425
    %vm608 = vcmp.eq.s32.totalorder %v574, %v425
    %vm609 = vcmp.eq.s32.totalorder %v577, %v425
    %vm610 = vcmp.eq.s32.totalorder %v580, %v425
    %vm611 = vcmp.eq.s32.totalorder %v583, %v425
    %vm612 = vcmp.eq.s32.totalorder %v586, %v425
    %vm613 = vcmp.eq.s32.totalorder %v589, %v425
    %vm614 = vcmp.eq.s32.totalorder %v592, %v425
    %vm615 = vcmp.eq.s32.totalorder %v595, %v425
    %vm616 = vcmp.eq.s32.totalorder %v598, %v425
    %vm617 = vcmp.eq.s32.totalorder %v601, %v425
    %v618 = vsel %vm602, 1, 0
    %v619 = vsel %vm603, 1, 0
    %v620 = vsel %vm604, 1, 0
    %v621 = vsel %vm605, 1, 0
    %v622 = vsel %vm606, 1, 0
    %v623 = vsel %vm607, 1, 0
    %v624 = vsel %vm608, 1, 0
    %v625 = vsel %vm609, 1, 0
    %v626 = vsel %vm610, 1, 0
    %v627 = vsel %vm611, 1, 0
    %v628 = vsel %vm612, 1, 0
    %v629 = vsel %vm613, 1, 0
    %v630 = vsel %vm614, 1, 0
    %v631 = vsel %vm615, 1, 0
    %v632 = vsel %vm616, 1, 0
    %v633 = vsel %vm617, 1, 0
    %v634 = vcvt.s32.f32 %v618
    %v635 = vcvt.s32.f32 %v619
    %v636 = vcvt.s32.f32 %v620
    %v637 = vcvt.s32.f32 %v621
    %v638 = vcvt.s32.f32 %v622
    %v639 = vcvt.s32.f32 %v623
    %v640 = vcvt.s32.f32 %v624
    %v641 = vcvt.s32.f32 %v625
    %v642 = vcvt.s32.f32 %v626
    %v643 = vcvt.s32.f32 %v627
    %v644 = vcvt.s32.f32 %v628
    %v645 = vcvt.s32.f32 %v629
    %v646 = vcvt.s32.f32 %v630
    %v647 = vcvt.s32.f32 %v631
    %v648 = vcvt.s32.f32 %v632
    %v649 = vcvt.s32.f32 %v633
    %650 = vmatpush.msra.mxu0 %v422
    %651 = vmatpush.msra.mxu0 %v420
    %652 = vmatpush.msra.mxu0 %v417
    %653 = vmatpush.msra.mxu0 %v415
    %654 = vmatpush.msra.mxu0 %v412
    %655 = vmatpush.msra.mxu0 %v410
    %656 = vmatpush.msra.mxu0 %v407
    %657 = vmatpush.msra.mxu0 %v405
    %658 = vmatpush.msra.mxu0 %v402
    %659 = vmatpush.msra.mxu0 %v400
    %660 = vmatpush.msra.mxu0 %v397
    %661 = vmatpush.msra.mxu0 %v395
    %662 = vmatpush.msra.mxu0 %v392
    %663 = vmatpush.msra.mxu0 %v390
    %664 = vmatpush.msra.mxu0 %v387
    %665 = vmatpush.msra.mxu0 %v385
    %666 = vmatmul.f32.gmra.mxu0 %v522
    %v667 = vpop.f32.mrf.mxu0
    %v668 = vadd.f32 0.0, %v667
    %669 = vmatmul.f32.gmra.mxu0 %v523
    %v670 = vpop.f32.mrf.mxu0
    %v671 = vadd.f32 0.0, %v670
    %672 = vmatmul.f32.gmra.mxu0 %v524
    %v673 = vpop.f32.mrf.mxu0
    %v674 = vadd.f32 0.0, %v673
    %675 = vmatmul.f32.gmra.mxu0 %v525
    %v676 = vpop.f32.mrf.mxu0
    %v677 = vadd.f32 0.0, %v676
    %678 = vmatmul.f32.gmra.mxu0 %v526
    %v679 = vpop.f32.mrf.mxu0
    %v680 = vadd.f32 0.0, %v679
    %681 = vmatmul.f32.gmra.mxu0 %v527
    %v682 = vpop.f32.mrf.mxu0
    %v683 = vadd.f32 0.0, %v682
    %684 = vmatmul.f32.gmra.mxu0 %v528
    %v685 = vpop.f32.mrf.mxu0
    %v686 = vadd.f32 0.0, %v685
    %687 = vmatmul.f32.gmra.mxu0 %v529
    %v688 = vpop.f32.mrf.mxu0
    %v689 = vadd.f32 0.0, %v688
    %690 = vmatmul.f32.gmra.mxu0 %v530
    %v691 = vpop.f32.mrf.mxu0
    %v692 = vadd.f32 0.0, %v691
    %693 = vmatmul.f32.gmra.mxu0 %v531
    %v694 = vpop.f32.mrf.mxu0
    %v695 = vadd.f32 0.0, %v694
    %696 = vmatmul.f32.gmra.mxu0 %v532
    %v697 = vpop.f32.mrf.mxu0
    %v698 = vadd.f32 0.0, %v697
    %699 = vmatmul.f32.gmra.mxu0 %v533
    %v700 = vpop.f32.mrf.mxu0
    %v701 = vadd.f32 0.0, %v700
    %702 = vmatmul.f32.gmra.mxu0 %v534
    %v703 = vpop.f32.mrf.mxu0
    %v704 = vadd.f32 0.0, %v703
    %705 = vmatmul.f32.gmra.mxu0 %v535
    %v706 = vpop.f32.mrf.mxu0
    %v707 = vadd.f32 0.0, %v706
    %708 = vmatmul.f32.gmra.mxu0 %v536
    %v709 = vpop.f32.mrf.mxu0
    %v710 = vadd.f32 0.0, %v709
    %711 = vmatmul.f32.gmra.mxu0 %v537
    %v712 = vpop.f32.mrf.mxu0
    %v713 = vadd.f32 0.0, %v712
    %714 = vdwg.mxu0
    %715 = vmatpush.msra.mxu0 %v422
    %716 = vmatpush.msra.mxu0 %v420
    %717 = vmatpush.msra.mxu0 %v417
    %718 = vmatpush.msra.mxu0 %v415
    %719 = vmatpush.msra.mxu0 %v412
    %720 = vmatpush.msra.mxu0 %v410
    %721 = vmatpush.msra.mxu0 %v407
    %722 = vmatpush.msra.mxu0 %v405
    %723 = vmatpush.msra.mxu0 %v402
    %724 = vmatpush.msra.mxu0 %v400
    %725 = vmatpush.msra.mxu0 %v397
    %726 = vmatpush.msra.mxu0 %v395
    %727 = vmatpush.msra.mxu0 %v392
    %728 = vmatpush.msra.mxu0 %v390
    %729 = vmatpush.msra.mxu0 %v387
    %730 = vmatpush.msra.mxu0 %v385
    %731 = vmatmul.f32.gmra.mxu0 %v634
    %v732 = vpop.f32.mrf.mxu0
    %v733 = vadd.f32 0.0, %v732
    %734 = vmatmul.f32.gmra.mxu0 %v635
    %v735 = vpop.f32.mrf.mxu0
    %v736 = vadd.f32 0.0, %v735
    %737 = vmatmul.f32.gmra.mxu0 %v636
    %v738 = vpop.f32.mrf.mxu0
    %v739 = vadd.f32 0.0, %v738
    %740 = vmatmul.f32.gmra.mxu0 %v637
    %v741 = vpop.f32.mrf.mxu0
    %v742 = vadd.f32 0.0, %v741
    %743 = vmatmul.f32.gmra.mxu0 %v638
    %v744 = vpop.f32.mrf.mxu0
    %v745 = vadd.f32 0.0, %v744
    %746 = vmatmul.f32.gmra.mxu0 %v639
    %v747 = vpop.f32.mrf.mxu0
    %v748 = vadd.f32 0.0, %v747
    %749 = vmatmul.f32.gmra.mxu0 %v640
    %v750 = vpop.f32.mrf.mxu0
    %v751 = vadd.f32 0.0, %v750
    %752 = vmatmul.f32.gmra.mxu0 %v641
    %v753 = vpop.f32.mrf.mxu0
    %v754 = vadd.f32 0.0, %v753
    %755 = vmatmul.f32.gmra.mxu0 %v642
    %v756 = vpop.f32.mrf.mxu0
    %v757 = vadd.f32 0.0, %v756
    %758 = vmatmul.f32.gmra.mxu0 %v643
    %v759 = vpop.f32.mrf.mxu0
    %v760 = vadd.f32 0.0, %v759
    %761 = vmatmul.f32.gmra.mxu0 %v644
    %v762 = vpop.f32.mrf.mxu0
    %v763 = vadd.f32 0.0, %v762
    %764 = vmatmul.f32.gmra.mxu0 %v645
    %v765 = vpop.f32.mrf.mxu0
    %v766 = vadd.f32 0.0, %v765
    %767 = vmatmul.f32.gmra.mxu0 %v646
    %v768 = vpop.f32.mrf.mxu0
    %v769 = vadd.f32 0.0, %v768
    %770 = vmatmul.f32.gmra.mxu0 %v647
    %v771 = vpop.f32.mrf.mxu0
    %v772 = vadd.f32 0.0, %v771
    %773 = vmatmul.f32.gmra.mxu0 %v648
    %v774 = vpop.f32.mrf.mxu0
    %v775 = vadd.f32 0.0, %v774
    %776 = vmatmul.f32.gmra.mxu0 %v649
    %v777 = vpop.f32.mrf.mxu0
    %v778 = vadd.f32 0.0, %v777
    %779 = vdwg.mxu0
    %v780 = vld [vmem:[#allocation8] sm:$0xff]
    %v781 = vld [vmem:[#allocation8 + $0x8] sm:$0xff]
    %v782 = vld [vmem:[#allocation8 + $0x10] sm:$0xff]
    %v783 = vld [vmem:[#allocation8 + $0x18] sm:$0xff]
    %v784 = vld [vmem:[#allocation8 + $0x20] sm:$0xff]
    %v785 = vld [vmem:[#allocation8 + $0x28] sm:$0xff]
    %v786 = vld [vmem:[#allocation8 + $0x30] sm:$0xff]
    %v787 = vld [vmem:[#allocation8 + $0x38] sm:$0xff]
    %v788 = vld [vmem:[#allocation8 + $0x40] sm:$0xff]
    %v789 = vld [vmem:[#allocation8 + $0x48] sm:$0xff]
    %v790 = vld [vmem:[#allocation8 + $0x50] sm:$0xff]
    %v791 = vld [vmem:[#allocation8 + $0x58] sm:$0xff]
    %v792 = vld [vmem:[#allocation8 + $0x60] sm:$0xff]
    %v793 = vld [vmem:[#allocation8 + $0x68] sm:$0xff]
    %v794 = vld [vmem:[#allocation8 + $0x70] sm:$0xff]
    %v795 = vld [vmem:[#allocation8 + $0x78] sm:$0xff]
    %796 = vmatpush.msra.mxu0 %v795
    %797 = vmatpush.msra.mxu0 %v794
    %798 = vmatpush.msra.mxu0 %v793
    %799 = vmatpush.msra.mxu0 %v792
    %800 = vmatpush.msra.mxu0 %v791
    %801 = vmatpush.msra.mxu0 %v790
    %802 = vmatpush.msra.mxu0 %v789
    %803 = vmatpush.msra.mxu0 %v788
    %804 = vmatpush.msra.mxu0 %v787
    %805 = vmatpush.msra.mxu0 %v786
    %806 = vmatpush.msra.mxu0 %v785
    %807 = vmatpush.msra.mxu0 %v784
    %808 = vmatpush.msra.mxu0 %v783
    %809 = vmatpush.msra.mxu0 %v782
    %810 = vmatpush.msra.mxu0 %v781
    %811 = vmatpush.msra.mxu0 %v780
    %812 = vmatmul.f32.gmra.mxu0 %v668
    %v813 = vpop.f32.mrf.mxu0
    %v814 = vadd.f32 0.0, %v813
    %815 = vmatmul.f32.gmra.mxu0 %v671
    %v816 = vpop.f32.mrf.mxu0
    %v817 = vadd.f32 0.0, %v816
    %818 = vmatmul.f32.gmra.mxu0 %v674
    %v819 = vpop.f32.mrf.mxu0
    %v820 = vadd.f32 0.0, %v819
    %821 = vmatmul.f32.gmra.mxu0 %v677
    %v822 = vpop.f32.mrf.mxu0
    %v823 = vadd.f32 0.0, %v822
    %824 = vmatmul.f32.gmra.mxu0 %v680
    %v825 = vpop.f32.mrf.mxu0
    %v826 = vadd.f32 0.0, %v825
    %827 = vmatmul.f32.gmra.mxu0 %v683
    %v828 = vpop.f32.mrf.mxu0
    %v829 = vadd.f32 0.0, %v828
    %830 = vmatmul.f32.gmra.mxu0 %v686
    %v831 = vpop.f32.mrf.mxu0
    %v832 = vadd.f32 0.0, %v831
    %833 = vmatmul.f32.gmra.mxu0 %v689
    %v834 = vpop.f32.mrf.mxu0
    %v835 = vadd.f32 0.0, %v834
    %836 = vmatmul.f32.gmra.mxu0 %v692
    %v837 = vpop.f32.mrf.mxu0
    %v838 = vadd.f32 0.0, %v837
    %839 = vmatmul.f32.gmra.mxu0 %v695
    %v840 = vpop.f32.mrf.mxu0
    %v841 = vadd.f32 0.0, %v840
    %842 = vmatmul.f32.gmra.mxu0 %v698
    %v843 = vpop.f32.mrf.mxu0
    %v844 = vadd.f32 0.0, %v843
    %845 = vmatmul.f32.gmra.mxu0 %v701
    %v846 = vpop.f32.mrf.mxu0
    %v847 = vadd.f32 0.0, %v846
    %848 = vmatmul.f32.gmra.mxu0 %v704
    %v849 = vpop.f32.mrf.mxu0
    %v850 = vadd.f32 0.0, %v849
    %851 = vmatmul.f32.gmra.mxu0 %v707
    %v852 = vpop.f32.mrf.mxu0
    %v853 = vadd.f32 0.0, %v852
    %854 = vmatmul.f32.gmra.mxu0 %v710
    %v855 = vpop.f32.mrf.mxu0
    %v856 = vadd.f32 0.0, %v855
    %857 = vmatmul.f32.gmra.mxu0 %v713
    %v858 = vpop.f32.mrf.mxu0
    %v859 = vadd.f32 0.0, %v858
    %860 = vdwg.mxu0
    %861 = vmatpush.xpose.msra.mxu0 %v778
    %862 = vmatpush.xpose.msra.mxu0 %v775
    %863 = vmatpush.xpose.msra.mxu0 %v772
    %864 = vmatpush.xpose.msra.mxu0 %v769
    %865 = vmatpush.xpose.msra.mxu0 %v766
    %866 = vmatpush.xpose.msra.mxu0 %v763
    %867 = vmatpush.xpose.msra.mxu0 %v760
    %868 = vmatpush.xpose.msra.mxu0 %v757
    %869 = vmatpush.xpose.msra.mxu0 %v754
    %870 = vmatpush.xpose.msra.mxu0 %v751
    %871 = vmatpush.xpose.msra.mxu0 %v748
    %872 = vmatpush.xpose.msra.mxu0 %v745
    %873 = vmatpush.xpose.msra.mxu0 %v742
    %874 = vmatpush.xpose.msra.mxu0 %v739
    %875 = vmatpush.xpose.msra.mxu0 %v736
    %876 = vmatpush.xpose.msra.mxu0 %v733
    %877 = vmatmul.f32.gmra.mxu0 %v814
    %v878 = vpop.f32.mrf.mxu0
    %v879 = vadd.f32 0.0, %v878
    %880 = vmatmul.f32.gmra.mxu0 %v817
    %v881 = vpop.f32.mrf.mxu0
    %v882 = vadd.f32 0.0, %v881
    %883 = vmatmul.f32.gmra.mxu0 %v820
    %v884 = vpop.f32.mrf.mxu0
    %v885 = vadd.f32 0.0, %v884
    %886 = vmatmul.f32.gmra.mxu0 %v823
    %v887 = vpop.f32.mrf.mxu0
    %v888 = vadd.f32 0.0, %v887
    %889 = vmatmul.f32.gmra.mxu0 %v826
    %v890 = vpop.f32.mrf.mxu0
    %v891 = vadd.f32 0.0, %v890
    %892 = vmatmul.f32.gmra.mxu0 %v829
    %v893 = vpop.f32.mrf.mxu0
    %v894 = vadd.f32 0.0, %v893
    %895 = vmatmul.f32.gmra.mxu0 %v832
    %v896 = vpop.f32.mrf.mxu0
    %v897 = vadd.f32 0.0, %v896
    %898 = vmatmul.f32.gmra.mxu0 %v835
    %v899 = vpop.f32.mrf.mxu0
    %v900 = vadd.f32 0.0, %v899
    %901 = vmatmul.f32.gmra.mxu0 %v838
    %v902 = vpop.f32.mrf.mxu0
    %v903 = vadd.f32 0.0, %v902
    %904 = vmatmul.f32.gmra.mxu0 %v841
    %v905 = vpop.f32.mrf.mxu0
    %v906 = vadd.f32 0.0, %v905
    %907 = vmatmul.f32.gmra.mxu0 %v844
    %v908 = vpop.f32.mrf.mxu0
    %v909 = vadd.f32 0.0, %v908
    %910 = vmatmul.f32.gmra.mxu0 %v847
    %v911 = vpop.f32.mrf.mxu0
    %v912 = vadd.f32 0.0, %v911
    %913 = vmatmul.f32.gmra.mxu0 %v850
    %v914 = vpop.f32.mrf.mxu0
    %v915 = vadd.f32 0.0, %v914
    %916 = vmatmul.f32.gmra.mxu0 %v853
    %v917 = vpop.f32.mrf.mxu0
    %v918 = vadd.f32 0.0, %v917
    %919 = vmatmul.f32.gmra.mxu0 %v856
    %v920 = vpop.f32.mrf.mxu0
    %v921 = vadd.f32 0.0, %v920
    %922 = vmatmul.f32.gmra.mxu0 %v859
    %v923 = vpop.f32.mrf.mxu0
    %v924 = vadd.f32 0.0, %v923
    %925 = vdwg.mxu0
    %v926 = vlaneseq
    %v927 = vshrl.u32 %v926, 7
    %v928 = vadd.s32 %v927, 8
    %v929 = vadd.s32 %v927, 16
    %v930 = vadd.s32 %v927, 24
    %v931 = vadd.s32 %v927, 32
    %v932 = vadd.s32 %v927, 40
    %v933 = vadd.s32 %v927, 48
    %v934 = vadd.s32 %v927, 56
    %v935 = vadd.s32 %v927, 64
    %v936 = vadd.s32 %v927, 72
    %v937 = vadd.s32 %v927, 80
    %v938 = vadd.s32 %v927, 88
    %v939 = vadd.s32 %v927, 96
    %v940 = vadd.s32 %v927, 104
    %v941 = vadd.s32 %v927, 112
    %v942 = vadd.s32 %v927, 120
    %vm943 = vcmp.eq.s32.totalorder %v927, %v425
    %vm944 = vcmp.eq.s32.totalorder %v928, %v425
    %vm945 = vcmp.eq.s32.totalorder %v929, %v425
    %vm946 = vcmp.eq.s32.totalorder %v930, %v425
    %vm947 = vcmp.eq.s32.totalorder %v931, %v425
    %vm948 = vcmp.eq.s32.totalorder %v932, %v425
    %vm949 = vcmp.eq.s32.totalorder %v933, %v425
    %vm950 = vcmp.eq.s32.totalorder %v934, %v425
    %vm951 = vcmp.eq.s32.totalorder %v935, %v425
    %vm952 = vcmp.eq.s32.totalorder %v936, %v425
    %vm953 = vcmp.eq.s32.totalorder %v937, %v425
    %vm954 = vcmp.eq.s32.totalorder %v938, %v425
    %vm955 = vcmp.eq.s32.totalorder %v939, %v425
    %vm956 = vcmp.eq.s32.totalorder %v940, %v425
    %vm957 = vcmp.eq.s32.totalorder %v941, %v425
    %vm958 = vcmp.eq.s32.totalorder %v942, %v425
    %v959 = vsel %vm943, %v879, 0.0
    %v960 = vsel %vm944, %v882, 0.0
    %v961 = vsel %vm945, %v885, 0.0
    %v962 = vsel %vm946, %v888, 0.0
    %v963 = vsel %vm947, %v891, 0.0
    %v964 = vsel %vm948, %v894, 0.0
    %v965 = vsel %vm949, %v897, 0.0
    %v966 = vsel %vm950, %v900, 0.0
    %v967 = vsel %vm951, %v903, 0.0
    %v968 = vsel %vm952, %v906, 0.0
    %v969 = vsel %vm953, %v909, 0.0
    %v970 = vsel %vm954, %v912, 0.0
    %v971 = vsel %vm955, %v915, 0.0
    %v972 = vsel %vm956, %v918, 0.0
    %v973 = vsel %vm957, %v921, 0.0
    %v974 = vsel %vm958, %v924, 0.0
    %v975 = vadd.f32 %v959, %v960
    %v976 = vadd.f32 %v975, %v961
    %v977 = vadd.f32 %v976, %v962
    %v978 = vadd.f32 %v977, %v963
    %v979 = vadd.f32 %v978, %v964
    %v980 = vadd.f32 %v979, %v965
    %v981 = vadd.f32 %v980, %v966
    %v982 = vadd.f32 %v981, %v967
    %v983 = vadd.f32 %v982, %v968
    %v984 = vadd.f32 %v983, %v969
    %v985 = vadd.f32 %v984, %v970
    %v986 = vadd.f32 %v985, %v971
    %v987 = vadd.f32 %v986, %v972
    %v988 = vadd.f32 %v987, %v973
    %v989 = vadd.f32 %v988, %v974
    %v990 = vrot.slane %v989, 4
    %v991 = vadd.f32 %v989, %v990
    %v992 = vrot.slane %v991, 2
    %v993 = vadd.f32 %v991, %v992
    %v994 = vrot.slane %v993, 1
    %v995 = vadd.f32 %v993, %v994
    %s996 = sld [smem:[#allocation2]]
    %v997 = vstv %s996
    %v998 = vadd.f32 %v995, %v997
    %v999 = vxor.u32 %v998, 2147483648
    %v1000 = vmul.f32 %v999, 1.442695
    %v1001 = vpow.pop %v1000
    %v1002 = vadd.f32 %v1001, 1.0
    %v1003 = vrcp.pop %v1002
    %v1004 = vmul.f32 %v1002, %v1003
    %v1005 = vsub.f32 1.0, %v1004
    %v1006 = vmul.f32 %v1003, %v1005
    %v1007 = vadd.f32 %v1003, %v1006
    %vm1008 = vweird.f32 %v1002
    %vm1009 = vweird.f32 %v1003
    %vm1010 = vmor %vm1008, %vm1009
    %v1011 = vsel %vm1010, %v1003, %v1007
    %v1012 = vand.u32 2147483647, %v1002
    %vm1013 = vcmp.eq.f32.partialorder %v1012, 8.507059e+37
    %v1014 = vand.u32 %v1002, 2147483648
    %v1015 = vor.u32 1.1754944e-38, %v1014
    %v1016 = vsel %vm1013, %v1015, %v1011
    %v1017 = vmul.f32 1.0, %v1016
    %1018 = vst [vmem:[#allocation9] sm:$0x1] %v1017
    // Predicated region
    $region54: #{tpu_custom_call.1} parent=1 // pred_check
      _
    $region55: #{tpu_custom_call.1} parent=1 // pred_check_branch
      %1020 = sbr.rel (0) target = $region57
    $region56: #{tpu_custom_call.1} parent=1 // pred_region
      %1022 = vsyncadd [#allocation5], 0
      %s1024 = sshll.u32 [#allocation9], 4
      %s1025 = int_to_ptr.vmem [resolvable:$true] %s1024
      %s1026 = sshll.u32 %s10, 4
      %s1027 = int_to_ptr.hbm [resolvable:$true] %s1026
      %1029 = dma.vmem_to_hbm [thread:$0]  %s1025, 16, %s1027, [#allocation5]
    $region57: #{tpu_custom_call.1} parent=1 // pred_fallthru
      _
    // Predicated region
    $region58: #{tpu_custom_call.1} parent=1 // pred_check
      _
    $region59: #{tpu_custom_call.1} parent=1 // pred_check_branch
      %1031 = sbr.rel (0) target = $region61
    $region60: #{tpu_custom_call.1} parent=1 // pred_region
      %1033 = dma.done [#allocation5], 16
    $region61: #{tpu_custom_call.1} parent=1 // pred_fallthru
      _
    %1034 = vsyncpa [#allocation4], 1
    %1035 = vsyncpa [#allocation7], 1
    %1036 = vsyncpa [#allocation5], 1

</llo_original>
